<compile_context>
chip_gen: v6e
topology: v6e:2x2x1
jax: 0.10.0
libtpu: 0.0.40
codegen_flags: <defaults>
</compile_context>

<pallas_src>
import jax
import jax.numpy as jnp
from jax.experimental import pallas as pl
from jax.experimental.pallas import tpu as pltpu

_LANES = 128
# itemsize (bytes) -> sublane packing of one vreg
_SUBLANE = {1: 32, 2: 16, 4: 8, 8: 8}


# ---------------------------------------------------------------------------
# Primary path: true no-op (output aliased to input, zero HBM traffic).
# ---------------------------------------------------------------------------
def _identity_alias_kernel(x_ref, o_ref):
    # o_ref IS x_ref's buffer (input_output_aliases={0: 0}); touch() just pins
    # a read+write dependency so the custom call is well formed.  No DMA.
    del x_ref
    pltpu.touch(o_ref)


def _identity_alias(x):
    return pl.pallas_call(
        _identity_alias_kernel,
        out_shape=jax.ShapeDtypeStruct(x.shape, x.dtype),
        in_specs=[pl.BlockSpec(memory_space=pl.ANY)],
        out_specs=pl.BlockSpec(memory_space=pl.ANY),
        input_output_aliases={0: 0},
    )(x)


# ---------------------------------------------------------------------------
# Fallback path: lane-dense tiled streaming copy (near HBM roofline).
# ---------------------------------------------------------------------------
def _identity_copy_kernel(x_ref, o_ref):
    # Whole-tile copy: unmasked full-vreg vld/vst streams, no VPU work.
    o_ref[...] = x_ref[...]


def _identity_copy(x):
    orig_shape = x.shape
    total = int(x.size)
    if total == 0:
        return x

    itemsize = jnp.dtype(x.dtype).itemsize
    sublane = _SUBLANE.get(itemsize, 8)

    # Wrapper-side layout plumbing: present a lane-dense (rows, 128) slab so
    # every store is an unmasked vst.  Pad the flat tail if needed.
    pad = (-total) % _LANES
    flat = x.reshape(-1)
    if pad:
        flat = jnp.concatenate([flat, jnp.zeros((pad,), x.dtype)])
    rows = (total + pad) // _LANES
    x2 = flat.reshape(rows, _LANES)

    # Fixed ~4 MiB block, aligned to the dtype's sublane packing.  In+out,
    # double-buffered => <=16 MiB of VMEM; vmem_limit_bytes below guarantees
    # that fits on every generation (v5e default scoped VMEM is only 16 MiB).
    target_rows = max(sublane, (4 * 1024 * 1024) // (_LANES * itemsize))
    tr = min(rows, target_rows)
    if rows >= sublane:
        tr = max(sublane, (tr // sublane) * sublane)
    grid = (pl.cdiv(rows, tr),)   # Pallas masks the ragged last block

    y2 = pl.pallas_call(
        _identity_copy_kernel,
        out_shape=jax.ShapeDtypeStruct(x2.shape, x2.dtype),
        grid=grid,
        in_specs=[pl.BlockSpec((tr, _LANES), lambda i: (i, 0))],
        out_specs=pl.BlockSpec((tr, _LANES), lambda i: (i, 0)),
        compiler_params=pltpu.CompilerParams(
            dimension_semantics=("parallel",),
            vmem_limit_bytes=32 * 1024 * 1024),
        cost_estimate=pl.CostEstimate(
            flops=0, transcendentals=0,
            bytes_accessed=2 * total * itemsize),
    )(x2)

    flat_out = y2.reshape(-1)
    if pad:
        flat_out = flat_out[:total]
    return flat_out.reshape(orig_shape)


def identity_pallas(x):
    """y = x.  Primary: aliased no-op (zero HBM traffic).  Fallback: copy."""
    try:
        return _identity_alias(x)
    except Exception:  # pragma: no cover — lowering fallback only
        return _identity_copy(x)


if __name__ == "__main__":
    # Small deterministic input consistent with the module's usage (NCHW image).
    N, C, H, W = 2, 4, 16, 16
    key = jax.random.PRNGKey(0)
    x = jax.random.normal(key, (N, C, H, W), jnp.float32)
    x_host = jax.device_get(x)  # host reference copy (safe vs. aliasing)

    # Primary (aliased no-op) path.
    out = jax.block_until_ready(identity_pallas(x))
    assert out.shape == x_host.shape, (out.shape, x_host.shape)
    assert out.dtype == x_host.dtype, (out.dtype, x_host.dtype)
    err = float(jnp.max(jnp.abs(out - jnp.asarray(x_host))))
    assert err == 0.0, f"identity (alias path) mismatch: max abs err {err}"

    # Also exercise the streaming-copy fallback kernel once.
    out2 = jax.block_until_ready(_identity_copy(jnp.asarray(x_host)))
    assert out2.shape == x_host.shape and out2.dtype == x_host.dtype
    err2 = float(jnp.max(jnp.abs(out2 - jnp.asarray(x_host))))
    assert err2 == 0.0, f"identity (copy path) mismatch: max abs err {err2}"

    print("KERNEL_OK")
</pallas_src>

<mosaic_0001>
module attributes {stable_mosaic.version = 11 : i64} {
  func.func @_identity_alias_kernel(%arg0: memref<2x4x16x16xf32, #tpu.memory_space<any>>, %arg1: memref<2x4x16x16xf32, #tpu.memory_space<any>>) attributes {dimension_semantics = [], scalar_prefetch = 0 : i64, scratch_operands = 0 : i64, tpu.core_type = #tpu.core_type<tc>} {
    return
  }
}

module attributes {stable_mosaic.version = 11 : i64} {
  func.func @_identity_copy_kernel(%arg0: i32, %arg1: memref<16x128xf32, #tpu.memory_space<vmem>>, %arg2: memref<16x128xf32, #tpu.memory_space<vmem>>) attributes {dimension_semantics = [#tpu.dimension_semantics<parallel>], iteration_bounds = array<i64: 1>, scalar_prefetch = 0 : i64, scratch_operands = 0 : i64, tpu.core_type = #tpu.core_type<tc>, window_params = [{transform_indices = @transform_0, window_bounds = array<i64: 16, 128>}, {transform_indices = @transform_1, window_bounds = array<i64: 16, 128>}]} {
    %c0 = arith.constant 0 : index
    %c0_0 = arith.constant 0 : index
    %0 = vector.load %arg1[%c0, %c0_0] : memref<16x128xf32, #tpu.memory_space<vmem>>, vector<16x128xf32>
    %c0_1 = arith.constant 0 : index
    %c0_2 = arith.constant 0 : index
    %1 = vector.load %arg2[%c0_1, %c0_2] : memref<16x128xf32, #tpu.memory_space<vmem>>, vector<16x128xf32>
    tpu.vector_store %arg2[%c0_1, %c0_2], %0 {strides = array<i32>} : memref<16x128xf32, #tpu.memory_space<vmem>>, vector<16x128xf32>,
    return
  }
  func.func @transform_0(%arg0: i32) -> (i32, i32) {
    %c0_i32 = arith.constant 0 : i32
    %c0_i32_0 = arith.constant 0 : i32
    return %arg0, %c0_i32 : i32, i32
  }
  func.func @transform_1(%arg0: i32) -> (i32, i32) {
    %c0_i32 = arith.constant 0 : i32
    %c0_i32_0 = arith.constant 0 : i32
    return %arg0, %c0_i32 : i32, i32
  }
}

</mosaic_0001>

<llo_original>
// kernel: tpu_custom_call.1
$region0: #{tpu_custom_call.1}
  #allocation0 [shape = 'u32[]', space=smem, size = 0x4, offset = 0x4, fixed_abs, tag = 'smem constant byte address 0x4 - core index']
  #allocation1 [shape = 'u32[144,128]{1,0:T(1,128)}', space=vmem, size = 0x12000, scoped, tag = 'internal scratch']
  %s0 = inlined_call_operand.hbm [shape: f32[2,4,16,16], index: 0, kind: input, shape index: {}, may-alias: {0,1}]
  %s1 = inlined_call_operand.hbm [shape: f32[2,4,16,16], index: 1, kind: output, shape index: {}, may-alias: {0,1}]
  %s2 = sld [smem:[#allocation0]]
  $region2: #{tpu_custom_call.1} parent=0
    _
  %s4 = ssub.s32 1, %s2
  %s5 = scalar_select 0, %s4, %s2

// kernel: tpu_custom_call.1
$region0: #{tpu_custom_call.1}
  #allocation0 [shape = 'u32[]', space=smem, size = 0x4, offset = 0x4, fixed_abs, tag = 'smem constant byte address 0x4 - core index']
  #allocation1 [shape = 'u32[144,128]{1,0:T(1,128)}', space=vmem, size = 0x12000, scoped, tag = 'internal scratch']
  %s0 = inlined_call_operand.hbm [shape: f32[16,128], index: 0, kind: input, shape index: {}]
  %s1 = inlined_call_operand.hbm [shape: f32[16,128], index: 1, kind: output, shape index: {}]
  %s2 = sld [smem:[#allocation0]]
  $region18: #{tpu_custom_call.1} parent=0
    _
  %s4 = ssub.s32 1, %s2
  %s5 = scalar_select 0, %s4, %s2
  $region1: #{tpu_custom_call.1} parent=0
    #allocation2 [shape = 'u8[8192]{0}', space=vmem, size = 0x2000, scoped, tag = 'input window, operand 0, single buffered']
    #allocation3 [shape = 's32[1]{0}', space=sflag, size = 0x4, scoped, tag = 'scoped memory for tpu_custom_call.1']
    #allocation4 [shape = 's32[1]{0}', space=sflag, size = 0x4, scoped, tag = 'scoped memory for tpu_custom_call.1']
    #allocation5 [shape = 'u8[8192]{0}', space=vmem, size = 0x2000, scoped, tag = 'output window, operand 0, single buffered']
    %6 = vsyncpa [#allocation3], 0
    %7 = vsyncpa [#allocation4], 0
    // Predicated region
    $region2: #{tpu_custom_call.1} parent=1 // pred_check
      _
    $region3: #{tpu_custom_call.1} parent=1 // pred_check_branch
      %9 = sbr.rel (0) target = $region5
    $region4: #{tpu_custom_call.1} parent=1 // pred_region
      %s11 = ssub.s32 256, 256
      %12 = vsyncadd [#allocation3], %s11
      %s13 = sshll.u32 [#allocation2], 4
      %s14 = int_to_ptr.vmem [resolvable:$true] %s13
      %19 = dma.hbm_to_vmem [thread:$0]  %s0, 256, %s14, [#allocation3], 128, 128, 8
    $region5: #{tpu_custom_call.1} parent=1 // pred_fallthru
      _
    // Predicated region
    $region6: #{tpu_custom_call.1} parent=1 // pred_check
      _
    $region7: #{tpu_custom_call.1} parent=1 // pred_check_branch
      %21 = sbr.rel (0) target = $region9
    $region8: #{tpu_custom_call.1} parent=1 // pred_region
      %22 = dma.done [#allocation3], 256
    $region9: #{tpu_custom_call.1} parent=1 // pred_fallthru
      _
    %v23 = vld [vmem:[#allocation2] sm:$0xff]
    %v24 = vld [vmem:[#allocation2 + $0x8] sm:$0xff]
    %25 = vst [vmem:[#allocation5] sm:$0xff] %v23
    %26 = vst [vmem:[#allocation5 + $0x8] sm:$0xff] %v24
    // Predicated region
    $region10: #{tpu_custom_call.1} parent=1 // pred_check
      _
    $region11: #{tpu_custom_call.1} parent=1 // pred_check_branch
      %28 = sbr.rel (0) target = $region13
    $region12: #{tpu_custom_call.1} parent=1 // pred_region
      %s30 = ssub.s32 256, 256
      %31 = vsyncadd [#allocation4], %s30
      %s32 = sshll.u32 [#allocation5], 4
      %s33 = int_to_ptr.vmem [resolvable:$true] %s32
      %38 = dma.vmem_to_hbm [thread:$0]  %s33, 256, %s1, [#allocation4], 128, 128, 8
    $region13: #{tpu_custom_call.1} parent=1 // pred_fallthru
      _
    // Predicated region
    $region14: #{tpu_custom_call.1} parent=1 // pred_check
      _
    $region15: #{tpu_custom_call.1} parent=1 // pred_check_branch
      %40 = sbr.rel (0) target = $region17
    $region16: #{tpu_custom_call.1} parent=1 // pred_region
      %41 = dma.done [#allocation4], 256
    $region17: #{tpu_custom_call.1} parent=1 // pred_fallthru
      _
    %42 = vsyncpa [#allocation3], 1
    %43 = vsyncpa [#allocation4], 1

</llo_original>
